<compile_context>
chip_gen: v6e
topology: v6e:2x2x1
jax: 0.10.0
libtpu: 0.0.40
codegen_flags: <defaults>
</compile_context>

<pallas_src>
import jax
import jax.numpy as jnp
from jax import lax
from jax.experimental import pallas as pl
from jax.experimental.pallas import tpu as pltpu


def _round_up(x: int, m: int) -> int:
    return ((x + m - 1) // m) * m


def _agg_matmul_kernel(x_ref, w_ref, o_ref):
    # x_ref: (tile_m, Dp) row tile of packed activations.
    # w_ref: (Dp, Dp) resident (block-diagonal) weight, nn.Linear layout (out, in).
    # Contract x's last axis against w's last axis  ==  x @ w.T  (nn.Linear),
    # so no transpose op is emitted anywhere.
    o_ref[...] = lax.dot_general(
        x_ref[...],
        w_ref[...],
        dimension_numbers=(((1,), (1,)), ((), ())),
        preferred_element_type=jnp.float32,
    ).astype(o_ref.dtype)


def aggregate_temporal_node_features(nodes_output, wq, *, tm=512):
    """nodes_output: (L, N, D) float32; wq: (D, D) nn.Linear weight (out, in).

    Returns (L*N, D) == concat over l of nodes_output[l] @ wq.T
    """
    L, N, D = nodes_output.shape
    M = L * N
    dtype = nodes_output.dtype

    # ---- lane-dense packing factor -------------------------------------------------
    if D < 128 and 128 % D == 0:
        P = 128 // D          # rows folded into one 128-lane row
    else:
        P = 1                 # D already lane-dense (or not evenly packable)
    Dp = P * D

    x = nodes_output.reshape(M, D)
    M1 = _round_up(M, P)
    if M1 != M:
        x = jnp.pad(x, ((0, M1 - M), (0, 0)))
    Mp = M1 // P
    x = x.reshape(Mp, Dp)

    if P > 1:
        # block_diag(wq): (Dp, Dp).  block_diag(wq).T == block_diag(wq.T), so the
        # kernel's last-axis contraction reproduces nn.Linear per D-wide chunk.
        eye = jnp.eye(P, dtype=wq.dtype)
        w = (eye[:, None, :, None] * wq[None, :, None, :]).reshape(Dp, Dp)
    else:
        w = wq

    # ---- M tiling: largest tile that covers the data (single step when small) ------
    tile_m = min(_round_up(tm, 8), _round_up(Mp, 8))
    Mp_pad = _round_up(Mp, tile_m)
    if Mp_pad != Mp:
        x = jnp.pad(x, ((0, Mp_pad - Mp), (0, 0)))

    grid = (Mp_pad // tile_m,)   # exact after padding (== pl.cdiv(Mp_pad, tile_m))

    out = pl.pallas_call(
        _agg_matmul_kernel,
        out_shape=jax.ShapeDtypeStruct((Mp_pad, Dp), dtype),
        grid_spec=pltpu.PrefetchScalarGridSpec(
            num_scalar_prefetch=0,
            grid=grid,
            in_specs=[
                # Row tile of the packed activations (lane-dense: last dim = Dp).
                pl.BlockSpec((tile_m, Dp), lambda i: (i, 0)),
                # Constant index_map: weight is fetched once and stays resident
                # across all grid steps (no per-step re-DMA).
                pl.BlockSpec((Dp, Dp), lambda i: (0, 0)),
            ],
            out_specs=pl.BlockSpec((tile_m, Dp), lambda i: (i, 0)),
        ),
        compiler_params=pltpu.CompilerParams(
            # Independent row tiles -> megacore sharding on v7x when grid > 1.
            dimension_semantics=("parallel",),
        ),
    )(x, w)

    # Undo padding / packing: (Mp_pad, Dp) -> (Mp, Dp) -> (M1, D) -> (M, D)
    out = out[:Mp].reshape(M1, D)[:M]
    return out


if __name__ == "__main__":
    # Small shapes implied by the module: L timesteps, N nodes, D = item_embed_dim.
    L, N, D = 8, 16, 32

    key = jax.random.PRNGKey(0)
    k_x, k_w = jax.random.split(key)
    nodes_output = jax.random.normal(k_x, (L, N, D), dtype=jnp.float32)
    # Deterministic synthetic init for Wq (nn.Linear(D, D, bias=False) weight, (out, in)).
    bound = 1.0 / (D ** 0.5)
    wq = jax.random.uniform(k_w, (D, D), dtype=jnp.float32, minval=-bound, maxval=bound)

    out = aggregate_temporal_node_features(nodes_output, wq)
    out = jax.block_until_ready(out)

    # Reference check (plain JAX) of the PyTorch semantics.
    ref = jnp.concatenate([nodes_output[l] @ wq.T for l in range(L)], axis=0)
    assert out.shape == (L * N, D), out.shape
    assert jnp.allclose(out, ref, atol=1e-5, rtol=1e-5)

    # Also exercise a non-divisible row count (odd L*N) to check the padding path.
    L2, N2 = 3, 7
    x2 = jax.random.normal(jax.random.PRNGKey(1), (L2, N2, D), dtype=jnp.float32)
    out2 = jax.block_until_ready(aggregate_temporal_node_features(x2, wq))
    ref2 = jnp.concatenate([x2[l] @ wq.T for l in range(L2)], axis=0)
    assert out2.shape == (L2 * N2, D)
    assert jnp.allclose(out2, ref2, atol=1e-5, rtol=1e-5)

    print("KERNEL_OK")
</pallas_src>

<mosaic_0001>
module attributes {stable_mosaic.version = 11 : i64} {
  func.func @_agg_matmul_kernel(%arg0: i32, %arg1: memref<32x128xf32, #tpu.memory_space<vmem>>, %arg2: memref<128x128xf32, #tpu.memory_space<vmem>>, %arg3: memref<32x128xf32, #tpu.memory_space<vmem>>) attributes {dimension_semantics = [#tpu.dimension_semantics<parallel>], iteration_bounds = array<i64: 1>, scalar_prefetch = 0 : i64, scratch_operands = 0 : i64, tpu.core_type = #tpu.core_type<tc>, window_params = [{transform_indices = @transform_0, window_bounds = array<i64: 32, 128>}, {pipeline_mode = #tpu.pipeline_mode<synchronous>, transform_indices = @transform_1, window_bounds = array<i64: 128, 128>}, {transform_indices = @transform_2, window_bounds = array<i64: 32, 128>}]} {
    %c0 = arith.constant 0 : index
    %c0_0 = arith.constant 0 : index
    %0 = vector.load %arg1[%c0, %c0_0] : memref<32x128xf32, #tpu.memory_space<vmem>>, vector<32x128xf32>
    %c0_1 = arith.constant 0 : index
    %c0_2 = arith.constant 0 : index
    %1 = vector.load %arg2[%c0_1, %c0_2] : memref<128x128xf32, #tpu.memory_space<vmem>>, vector<128x128xf32>
    %cst = arith.constant dense<0.000000e+00> : vector<32x128xf32>
    %2 = tpu.matmul %0, %1, %cst {dimension_numbers = #tpu.dot_dimension_numbers<[1], [1], [0], [0], [0, 0, 1, 0], [], []>} : vector<32x128xf32>, vector<128x128xf32>, vector<32x128xf32> -> vector<32x128xf32>
    %c0_3 = arith.constant 0 : index
    %c0_4 = arith.constant 0 : index
    %3 = vector.load %arg3[%c0_3, %c0_4] : memref<32x128xf32, #tpu.memory_space<vmem>>, vector<32x128xf32>
    tpu.vector_store %arg3[%c0_3, %c0_4], %2 {strides = array<i32>} : memref<32x128xf32, #tpu.memory_space<vmem>>, vector<32x128xf32>,
    return
  }
  func.func @transform_0(%arg0: i32) -> (i32, i32) {
    %c0_i32 = arith.constant 0 : i32
    %c0_i32_0 = arith.constant 0 : i32
    return %arg0, %c0_i32 : i32, i32
  }
  func.func @transform_1(%arg0: i32) -> (i32, i32) {
    %c0_i32 = arith.constant 0 : i32
    %c0_i32_0 = arith.constant 0 : i32
    %c0_i32_1 = arith.constant 0 : i32
    return %c0_i32, %c0_i32_0 : i32, i32
  }
  func.func @transform_2(%arg0: i32) -> (i32, i32) {
    %c0_i32 = arith.constant 0 : i32
    %c0_i32_0 = arith.constant 0 : i32
    return %arg0, %c0_i32 : i32, i32
  }
}

</mosaic_0001>

<llo_original>
// kernel: tpu_custom_call.1
$region0: #{tpu_custom_call.1}
  #allocation0 [shape = 'u32[]', space=smem, size = 0x4, offset = 0x4, fixed_abs, tag = 'smem constant byte address 0x4 - core index']
  #allocation1 [shape = 'u32[144,128]{1,0:T(1,128)}', space=vmem, size = 0x12000, scoped, tag = 'internal scratch']
  %s0 = inlined_call_operand.hbm [shape: f32[32,128], index: 0, kind: input, shape index: {}]
  %s1 = inlined_call_operand.hbm [shape: f32[128,128], index: 1, kind: input, shape index: {}]
  %s2 = inlined_call_operand.hbm [shape: f32[32,128], index: 2, kind: output, shape index: {}]
  %s3 = sld [smem:[#allocation0]]
  $region26: #{tpu_custom_call.1} parent=0
    _
  %s5 = ssub.s32 1, %s3
  %s6 = scalar_select 0, %s5, %s3
  $region1: #{tpu_custom_call.1} parent=0
    #allocation2 [shape = 'u8[16384]{0}', space=vmem, size = 0x4000, scoped, tag = 'input window, operand 0, single buffered']
    #allocation3 [shape = 's32[1]{0}', space=sflag, size = 0x4, scoped, tag = 'scoped memory for tpu_custom_call.1']
    #allocation4 [shape = 's32[1]{0}', space=sflag, size = 0x4, scoped, tag = 'scoped memory for tpu_custom_call.1']
    #allocation5 [shape = 'u8[65536]{0}', space=vmem, size = 0x10000, scoped, tag = 'input window, operand 1, single buffered']
    #allocation6 [shape = 's32[1]{0}', space=sflag, size = 0x4, scoped, tag = 'scoped memory for tpu_custom_call.1']
    #allocation7 [shape = 'u8[16384]{0}', space=vmem, size = 0x4000, scoped, tag = 'output window, operand 0, single buffered']
    %7 = vsyncpa [#allocation3], 0
    %8 = vsyncpa [#allocation6], 0
    %9 = vsyncpa [#allocation4], 0
    // Predicated region
    $region2: #{tpu_custom_call.1} parent=1 // pred_check
      _
    $region3: #{tpu_custom_call.1} parent=1 // pred_check_branch
      %11 = sbr.rel (0) target = $region5
    $region4: #{tpu_custom_call.1} parent=1 // pred_region
      %s13 = ssub.s32 512, 512
      %14 = vsyncadd [#allocation3], %s13
      %s15 = sshll.u32 [#allocation2], 4
      %s16 = int_to_ptr.vmem [resolvable:$true] %s15
      %21 = dma.hbm_to_vmem [thread:$0]  %s0, 512, %s16, [#allocation3], 128, 128, 8
    $region5: #{tpu_custom_call.1} parent=1 // pred_fallthru
      _
    // Predicated region
    $region6: #{tpu_custom_call.1} parent=1 // pred_check
      _
    $region7: #{tpu_custom_call.1} parent=1 // pred_check_branch
      %23 = sbr.rel (0) target = $region9
    $region8: #{tpu_custom_call.1} parent=1 // pred_region
      %s25 = ssub.s32 2048, 2048
      %26 = vsyncadd [#allocation6], %s25
      %s27 = sshll.u32 [#allocation5], 4
      %s28 = int_to_ptr.vmem [resolvable:$true] %s27
      %33 = dma.hbm_to_vmem [thread:$0]  %s1, 2048, %s28, [#allocation6], 128, 128, 8
    $region9: #{tpu_custom_call.1} parent=1 // pred_fallthru
      _
    // Predicated region
    $region10: #{tpu_custom_call.1} parent=1 // pred_check
      _
    $region11: #{tpu_custom_call.1} parent=1 // pred_check_branch
      %35 = sbr.rel (0) target = $region13
    $region12: #{tpu_custom_call.1} parent=1 // pred_region
      %36 = dma.done [#allocation3], 512
    $region13: #{tpu_custom_call.1} parent=1 // pred_fallthru
      _
    // Predicated region
    $region14: #{tpu_custom_call.1} parent=1 // pred_check
      _
    $region15: #{tpu_custom_call.1} parent=1 // pred_check_branch
      %38 = sbr.rel (0) target = $region17
    $region16: #{tpu_custom_call.1} parent=1 // pred_region
      %39 = dma.done [#allocation6], 2048
    $region17: #{tpu_custom_call.1} parent=1 // pred_fallthru
      _
    %v40 = vld [vmem:[#allocation2] sm:$0xff]
    %v41 = vld [vmem:[#allocation2 + $0x8] sm:$0xff]
    %v42 = vld [vmem:[#allocation2 + $0x10] sm:$0xff]
    %v43 = vld [vmem:[#allocation2 + $0x18] sm:$0xff]
    %v44 = vld [vmem:[#allocation5] sm:$0xff]
    %v45 = vld [vmem:[#allocation5 + $0x8] sm:$0xff]
    %v46 = vld [vmem:[#allocation5 + $0x10] sm:$0xff]
    %v47 = vld [vmem:[#allocation5 + $0x18] sm:$0xff]
    %v48 = vld [vmem:[#allocation5 + $0x20] sm:$0xff]
    %v49 = vld [vmem:[#allocation5 + $0x28] sm:$0xff]
    %v50 = vld [vmem:[#allocation5 + $0x30] sm:$0xff]
    %v51 = vld [vmem:[#allocation5 + $0x38] sm:$0xff]
    %v52 = vld [vmem:[#allocation5 + $0x40] sm:$0xff]
    %v53 = vld [vmem:[#allocation5 + $0x48] sm:$0xff]
    %v54 = vld [vmem:[#allocation5 + $0x50] sm:$0xff]
    %v55 = vld [vmem:[#allocation5 + $0x58] sm:$0xff]
    %v56 = vld [vmem:[#allocation5 + $0x60] sm:$0xff]
    %v57 = vld [vmem:[#allocation5 + $0x68] sm:$0xff]
    %v58 = vld [vmem:[#allocation5 + $0x70] sm:$0xff]
    %v59 = vld [vmem:[#allocation5 + $0x78] sm:$0xff]
    %60 = vmatprep.subr.mxu0 0.0
    %61 = vmatpush1.xpose.msra.mxu0 %v59
    %62 = vmatprep.subr.mxu0 0.0
    %63 = vmatpush1.xpose.msra.mxu0 %v58
    %64 = vmatprep.subr.mxu0 0.0
    %65 = vmatpush1.xpose.msra.mxu0 %v57
    %66 = vmatprep.subr.mxu0 0.0
    %67 = vmatpush1.xpose.msra.mxu0 %v56
    %68 = vmatprep.subr.mxu0 0.0
    %69 = vmatpush1.xpose.msra.mxu0 %v55
    %70 = vmatprep.subr.mxu0 0.0
    %71 = vmatpush1.xpose.msra.mxu0 %v54
    %72 = vmatprep.subr.mxu0 0.0
    %73 = vmatpush1.xpose.msra.mxu0 %v53
    %74 = vmatprep.subr.mxu0 0.0
    %75 = vmatpush1.xpose.msra.mxu0 %v52
    %76 = vmatprep.subr.mxu0 0.0
    %77 = vmatpush1.xpose.msra.mxu0 %v51
    %78 = vmatprep.subr.mxu0 0.0
    %79 = vmatpush1.xpose.msra.mxu0 %v50
    %80 = vmatprep.subr.mxu0 0.0
    %81 = vmatpush1.xpose.msra.mxu0 %v49
    %82 = vmatprep.subr.mxu0 0.0
    %83 = vmatpush1.xpose.msra.mxu0 %v48
    %84 = vmatprep.subr.mxu0 0.0
    %85 = vmatpush1.xpose.msra.mxu0 %v47
    %86 = vmatprep.subr.mxu0 0.0
    %87 = vmatpush1.xpose.msra.mxu0 %v46
    %88 = vmatprep.subr.mxu0 0.0
    %89 = vmatpush1.xpose.msra.mxu0 %v45
    %90 = vmatprep.subr.mxu0 0.0
    %91 = vmatpush1.xpose.msra.mxu0 %v44
    %92 = vmatprep.subr.mxu0 0.0
    %93 = vmatpush2.xpose.msra.mxu0 0.0
    %94 = vmatprep.subr.mxu0 0.0
    %95 = vmatpush2.xpose.msra.mxu0 0.0
    %96 = vmatprep.subr.mxu0 0.0
    %97 = vmatpush2.xpose.msra.mxu0 0.0
    %98 = vmatprep.subr.mxu0 0.0
    %99 = vmatpush2.xpose.msra.mxu0 0.0
    %100 = vmatprep.subr.mxu0 0.0
    %101 = vmatpush2.xpose.msra.mxu0 0.0
    %102 = vmatprep.subr.mxu0 0.0
    %103 = vmatpush2.xpose.msra.mxu0 0.0
    %104 = vmatprep.subr.mxu0 0.0
    %105 = vmatpush2.xpose.msra.mxu0 0.0
    %106 = vmatprep.subr.mxu0 0.0
    %107 = vmatpush2.xpose.msra.mxu0 0.0
    %108 = vmatprep.subr.mxu0 0.0
    %109 = vmatpush2.xpose.msra.mxu0 0.0
    %110 = vmatprep.subr.mxu0 0.0
    %111 = vmatpush2.xpose.msra.mxu0 0.0
    %112 = vmatprep.subr.mxu0 0.0
    %113 = vmatpush2.xpose.msra.mxu0 0.0
    %114 = vmatprep.subr.mxu0 0.0
    %115 = vmatpush2.xpose.msra.mxu0 0.0
    %116 = vmatprep.subr.mxu0 0.0
    %117 = vmatpush2.xpose.msra.mxu0 0.0
    %118 = vmatprep.subr.mxu0 0.0
    %119 = vmatpush2.xpose.msra.mxu0 0.0
    %120 = vmatprep.subr.mxu0 0.0
    %121 = vmatpush2.xpose.msra.mxu0 0.0
    %122 = vmatprep.subr.mxu0 0.0
    %123 = vmatpush2.xpose.msra.mxu0 0.0
    %124 = vmatprep.mubr.f32.mxu0 0.0
    %125 = vmatmul.mubr.f32.gmra.mxu0 %v40
    %v126 = vpop.f32.mrf.mxu0
    %v127 = vadd.f32 0.0, %v126
    %v128 = vpop.f32.mrf.mxu0
    %129 = vmatprep.mubr.f32.mxu0 0.0
    %130 = vmatmul.mubr.f32.gmra.mxu0 %v41
    %v131 = vpop.f32.mrf.mxu0
    %v132 = vadd.f32 0.0, %v131
    %v133 = vpop.f32.mrf.mxu0
    %134 = vmatprep.mubr.f32.mxu0 0.0
    %135 = vmatmul.mubr.f32.gmra.mxu0 %v42
    %v136 = vpop.f32.mrf.mxu0
    %v137 = vadd.f32 0.0, %v136
    %v138 = vpop.f32.mrf.mxu0
    %139 = vmatprep.mubr.f32.mxu0 0.0
    %140 = vmatmul.mubr.f32.gmra.mxu0 %v43
    %v141 = vpop.f32.mrf.mxu0
    %v142 = vadd.f32 0.0, %v141
    %v143 = vpop.f32.mrf.mxu0
    %144 = vdwg.mxu0
    %145 = vst [vmem:[#allocation7] sm:$0xff] %v127
    %146 = vst [vmem:[#allocation7 + $0x8] sm:$0xff] %v132
    %147 = vst [vmem:[#allocation7 + $0x10] sm:$0xff] %v137
    %148 = vst [vmem:[#allocation7 + $0x18] sm:$0xff] %v142
    // Predicated region
    $region18: #{tpu_custom_call.1} parent=1 // pred_check
      _
    $region19: #{tpu_custom_call.1} parent=1 // pred_check_branch
      %150 = sbr.rel (0) target = $region21
    $region20: #{tpu_custom_call.1} parent=1 // pred_region
      %s152 = ssub.s32 512, 512
      %153 = vsyncadd [#allocation4], %s152
      %s154 = sshll.u32 [#allocation7], 4
      %s155 = int_to_ptr.vmem [resolvable:$true] %s154
      %160 = dma.vmem_to_hbm [thread:$0]  %s155, 512, %s2, [#allocation4], 128, 128, 8
    $region21: #{tpu_custom_call.1} parent=1 // pred_fallthru
      _
    // Predicated region
    $region22: #{tpu_custom_call.1} parent=1 // pred_check
      _
    $region23: #{tpu_custom_call.1} parent=1 // pred_check_branch
      %162 = sbr.rel (0) target = $region25
    $region24: #{tpu_custom_call.1} parent=1 // pred_region
      %163 = dma.done [#allocation4], 512
    $region25: #{tpu_custom_call.1} parent=1 // pred_fallthru
      _
    %164 = vsyncpa [#allocation3], 1
    %165 = vsyncpa [#allocation6], 1
    %166 = vsyncpa [#allocation4], 1

</llo_original>
